<compile_context>
chip_gen: v7x
topology: tpu7x:2x2x1
jax: 0.10.0
libtpu: 0.0.40
codegen_flags: <defaults>
</compile_context>

<pallas_src>
import jax
import jax.numpy as jnp
from jax.experimental import pallas as pl
from jax.experimental.pallas import tpu as pltpu


def _round_up(x, m):
    return (x + m - 1) // m * m


def _sublane(dtype):
    return {4: 8, 2: 16, 1: 32}.get(jnp.dtype(dtype).itemsize, 8)


def _tpu_vmem_capacity_bytes():
    try:
        return int(pltpu.get_tpu_info().vmem_capacity_bytes)
    except Exception:
        return 128 * 2**20  # v5e / v6e default


def _vmem_budget_and_tm_cap():
    cap = _tpu_vmem_capacity_bytes()
    if cap <= 64 * 2**20:
        # v7x-class: 64 MiB physical per TensorCore -> never ask for all of it,
        # and spend VMEM on tm (intensity) rather than huge tn.
        budget, tm_cap = min(52 * 2**20, cap - 8 * 2**20), 512
    else:
        # v5e / v6e: 128 MiB physical -> allow bigger tiles than the old 64 MiB cap.
        budget, tm_cap = min(100 * 2**20, cap - 16 * 2**20), 1024
    return max(budget, 16 * 2**20), tm_cap


def _vmem_bytes(tm, tn, d_in_p, d_hid_p, in_itemsize, out_itemsize, needs_acc):
    """Exact per-buffer VMEM footprint (default double-buffered pipelined blocks)."""
    b = 2 * tm * d_in_p * in_itemsize          # x row tile
    b += 2 * d_in_p * tn * in_itemsize         # W1^T hidden tile
    b += 2 * tn * d_in_p * in_itemsize         # W2^T hidden tile
    b += 2 * d_hid_p * in_itemsize             # b1 (whole, constant block index)
    b += 2 * d_in_p * in_itemsize              # b2 (whole, constant block index)
    b += 2 * tm * d_in_p * out_itemsize        # output row tile
    if needs_acc:
        b += tm * d_in_p * 4                   # f32 accumulator scratch
    b += tm * tn * (4 + in_itemsize)           # f32 h + its cast copy for 2nd dot
    return b


_TM_CANDIDATES = (1024, 896, 768, 640, 512, 448, 384, 320, 256, 192, 128)


def _pick_tm(M, sublane, tm_cap, fits):
    """Choose (tm, M_p): row-tile size and padded row count."""
    M_sub = _round_up(M, sublane)
    cands = [c for c in _TM_CANDIDATES
             if c <= tm_cap and c % sublane == 0 and fits(c)]
    max_fit = cands[0] if cands else sublane

    if M_sub <= max_fit:
        # Moderate M: prefer two equal row tiles (feeds both v7x TensorCores)
        # as long as each half is still MXU-friendly; else one full-extent tile.
        half = _round_up((M_sub + 1) // 2, sublane)
        if half >= 128 and fits(half):
            return half, 2 * half
        return M_sub, M_sub

    if not cands:
        return sublane, M_sub

    # Large M: biggest fitting tile whose row padding wastes < ~12.5%;
    # otherwise the fitting tile with minimal padding.
    def pad(tm):
        return _round_up(M_sub, tm) - M_sub

    good = [tm for tm in cands if pad(tm) * 8 <= M_sub]
    tm = good[0] if good else min(cands, key=pad)
    return tm, _round_up(M_sub, tm)


def _ffn_kernel_f32_out(x_ref, w1_ref, b1_ref, w2_ref, b2_ref, o_ref):
    """relu(x @ W1^T + b1) @ W2^T + b2, accumulating directly into the f32 output."""
    k = pl.program_id(1)

    @pl.when(k == 0)
    def _init():
        o_ref[...] = jnp.zeros_like(o_ref)

    # First matmul + bias + ReLU for this hidden tile (native-dtype MXU operands,
    # f32 accumulation). b1 rows are pre-tiled: row k holds the bias for tile k.
    h = jnp.dot(x_ref[...], w1_ref[...], preferred_element_type=jnp.float32)
    h = jnp.maximum(h + b1_ref[pl.ds(k, 1), :].astype(jnp.float32), 0.0)
    # Dropout (p=0.2) is identity in eval mode.

    # Second matmul: contract this hidden tile into the VMEM-resident f32 output.
    o_ref[...] += jnp.dot(h.astype(w2_ref.dtype), w2_ref[...],
                          preferred_element_type=jnp.float32)

    @pl.when(k == pl.num_programs(1) - 1)
    def _finalize():
        o_ref[...] += b2_ref[...].astype(jnp.float32)


def _ffn_kernel_acc(x_ref, w1_ref, b1_ref, w2_ref, b2_ref, o_ref, acc_ref):
    """Same computation, with an f32 scratch accumulator for non-f32 outputs."""
    k = pl.program_id(1)

    @pl.when(k == 0)
    def _init():
        acc_ref[...] = jnp.zeros_like(acc_ref)

    h = jnp.dot(x_ref[...], w1_ref[...], preferred_element_type=jnp.float32)
    h = jnp.maximum(h + b1_ref[pl.ds(k, 1), :].astype(jnp.float32), 0.0)
    # Dropout (p=0.2) is identity in eval mode.
    acc_ref[...] += jnp.dot(h.astype(w2_ref.dtype), w2_ref[...],
                            preferred_element_type=jnp.float32)

    @pl.when(k == pl.num_programs(1) - 1)
    def _finalize():
        o_ref[...] = (acc_ref[...] + b2_ref[...].astype(jnp.float32)).astype(o_ref.dtype)


def _ffn_pallas(x2d, w1t, b1r, w2t, b2r, *, tm, tn, out_dtype, vmem_limit):
    """x2d: (M_p, d_in_p); w1t: (d_in_p, d_hid_p); b1r: (n_k, tn); w2t: (d_hid_p, d_in_p)."""
    M_p, d_in_p = x2d.shape
    d_hid_p = w1t.shape[1]
    n_k = d_hid_p // tn
    needs_acc = jnp.dtype(out_dtype) != jnp.dtype(jnp.float32)

    kernel = _ffn_kernel_acc if needs_acc else _ffn_kernel_f32_out
    scratch = [pltpu.VMEM((tm, d_in_p), jnp.float32)] if needs_acc else []

    return pl.pallas_call(
        kernel,
        out_shape=jax.ShapeDtypeStruct((M_p, d_in_p), out_dtype),
        grid_spec=pltpu.PrefetchScalarGridSpec(
            num_scalar_prefetch=0,
            grid=(M_p // tm, n_k),                                 # (row tiles, hidden tiles)
            in_specs=[
                pl.BlockSpec((tm, d_in_p), lambda i, k: (i, 0)),   # x rows (resident across k)
                pl.BlockSpec((d_in_p, tn), lambda i, k: (0, k)),   # W1^T hidden tile
                pl.BlockSpec((n_k, tn), lambda i, k: (0, 0)),      # b1, whole, DMA'd once
                pl.BlockSpec((tn, d_in_p), lambda i, k: (k, 0)),   # W2^T hidden tile
                pl.BlockSpec((1, d_in_p), lambda i, k: (0, 0)),    # b2, whole, DMA'd once
            ],
            out_specs=pl.BlockSpec((tm, d_in_p), lambda i, k: (i, 0)),
            scratch_shapes=scratch,
        ),
        compiler_params=pltpu.CompilerParams(
            dimension_semantics=("parallel", "arbitrary"),
            vmem_limit_bytes=int(vmem_limit),
        ),
    )(x2d, w1t, b1r, w2t, b2r)


def make_feed_forward(w1, b1, w2, b2, *, compute_dtype=None):
    """Prepare (cast + transpose + zero-pad) parameters once; return x -> y closure.

    PyTorch layout: w1 (d_hid, d_in), b1 (d_hid,), w2 (d_in, d_hid), b2 (d_in,).
    Returned fn maps x (B, T, d_in) -> (B, T, d_in) in eval mode (dropout = identity).
    compute_dtype: MXU-operand dtype (defaults to w1.dtype). Pass jnp.bfloat16 for
    ~4x MXU rate / 2x weight-streaming bandwidth when the accuracy budget allows.
    """
    w1 = jnp.asarray(w1); b1 = jnp.asarray(b1)
    w2 = jnp.asarray(w2); b2 = jnp.asarray(b2)
    d_hid, d_in = w1.shape
    compute_dtype = jnp.dtype(compute_dtype if compute_dtype is not None else w1.dtype)
    in_itemsize = compute_dtype.itemsize

    d_in_p = _round_up(d_in, 128)
    d_hid_p = _round_up(d_hid, 128)            # pad hidden only to 128, not to tn

    budget, tm_cap = _vmem_budget_and_tm_cap()

    # Hidden tile: largest multiple of 128 <= 512 that divides d_hid_p and whose
    # weight tiles fit the budget at a modest row tile (128 always divides).
    tn = 128
    for cand in (512, 384, 256, 128):
        if d_hid_p % cand == 0 and _vmem_bytes(min(256, tm_cap), cand, d_in_p,
                                               d_hid_p, in_itemsize, 4, True) <= budget:
            tn = cand
            break

    def pad2(a, r, c):
        return jnp.pad(a, ((0, r - a.shape[0]), (0, c - a.shape[1])))

    # One-time parameter prep (transpose / cast / pad hoisted out of the call path).
    w1t = pad2(w1.T.astype(compute_dtype), d_in_p, d_hid_p)           # (d_in_p, d_hid_p)
    w2t = pad2(w2.T.astype(compute_dtype), d_hid_p, d_in_p)           # (d_hid_p, d_in_p)
    b1r = pad2(b1.reshape(1, -1).astype(compute_dtype), 1, d_hid_p)   # (1, d_hid_p)
    b1r = b1r.reshape(d_hid_p // tn, tn)                              # row k = bias of tile k
    b2r = pad2(b2.reshape(1, -1).astype(compute_dtype), 1, d_in_p)    # (1, d_in_p)

    @jax.jit
    def forward(x):
        B, T, _ = x.shape
        M = B * T
        out_dtype = x.dtype
        out_itemsize = jnp.dtype(out_dtype).itemsize
        needs_acc = jnp.dtype(out_dtype) != jnp.dtype(jnp.float32)
        sub = max(_sublane(compute_dtype), _sublane(out_dtype))

        def fits(tm):
            return _vmem_bytes(tm, tn, d_in_p, d_hid_p, in_itemsize,
                               out_itemsize, needs_acc) <= budget

        tm, M_p = _pick_tm(M, sub, tm_cap, fits)
        exact = _vmem_bytes(tm, tn, d_in_p, d_hid_p, in_itemsize,
                            out_itemsize, needs_acc)
        vmem_limit = min(max(exact + exact // 4, 16 * 2**20), max(budget, exact))

        x2d = x.reshape(M, d_in).astype(compute_dtype)
        x2d = jnp.pad(x2d, ((0, M_p - M), (0, d_in_p - d_in)))
        out2d = _ffn_pallas(x2d, w1t, b1r, w2t, b2r, tm=tm, tn=tn,
                            out_dtype=out_dtype, vmem_limit=vmem_limit)
        return out2d[:M, :d_in].reshape(B, T, d_in)

    return forward


if __name__ == "__main__":
    # Small shapes consistent with the module: x is (B, T, C=d_in)
    B, T, d_in, d_hid = 2, 8, 32, 64

    key = jax.random.PRNGKey(0)
    kx, k1, k2, k3, k4 = jax.random.split(key, 5)

    x = jax.random.normal(kx, (B, T, d_in), dtype=jnp.float32)

    # Deterministic parameter init (PyTorch Linear shapes: weight (out, in), bias (out,))
    bound1 = 1.0 / (d_in ** 0.5)
    w1 = jax.random.uniform(k1, (d_hid, d_in), jnp.float32, -bound1, bound1)
    b1 = jax.random.uniform(k2, (d_hid,), jnp.float32, -bound1, bound1)
    bound2 = 1.0 / (d_hid ** 0.5)
    w2 = jax.random.uniform(k3, (d_in, d_hid), jnp.float32, -bound2, bound2)
    b2 = jax.random.uniform(k4, (d_in,), jnp.float32, -bound2, bound2)

    ffn = make_feed_forward(w1, b1, w2, b2)
    out = ffn(x)
    jax.block_until_ready(out)

    # Reference check in plain JAX (eval-mode dropout = identity).
    ref = jnp.maximum(x @ w1.T + b1, 0.0) @ w2.T + b2
    assert out.shape == (B, T, d_in)
    assert jnp.allclose(out, ref, atol=1e-5, rtol=1e-5)

    print("KERNEL_OK")
</pallas_src>

<mosaic_0001>
module attributes {stable_mosaic.version = 11 : i64} {
  func.func @_ffn_kernel_f32_out(%arg0: i32, %arg1: i32, %arg2: memref<16x128xf32, #tpu.memory_space<vmem>>, %arg3: memref<128x128xf32, #tpu.memory_space<vmem>>, %arg4: memref<1x128xf32, #tpu.memory_space<vmem>>, %arg5: memref<128x128xf32, #tpu.memory_space<vmem>>, %arg6: memref<1x128xf32, #tpu.memory_space<vmem>>, %arg7: memref<16x128xf32, #tpu.memory_space<vmem>>) attributes {dimension_semantics = [#tpu.dimension_semantics<parallel>, #tpu.dimension_semantics<arbitrary>], iteration_bounds = array<i64: 1, 1>, scalar_prefetch = 0 : i64, scratch_operands = 0 : i64, tpu.core_type = #tpu.core_type<tc>, window_params = [{transform_indices = @transform_0, window_bounds = array<i64: 16, 128>}, {transform_indices = @transform_1, window_bounds = array<i64: 128, 128>}, {pipeline_mode = #tpu.pipeline_mode<synchronous>, transform_indices = @transform_2, window_bounds = array<i64: 1, 128>}, {transform_indices = @transform_3, window_bounds = array<i64: 128, 128>}, {pipeline_mode = #tpu.pipeline_mode<synchronous>, transform_indices = @transform_4, window_bounds = array<i64: 1, 128>}, {transform_indices = @transform_5, window_bounds = array<i64: 16, 128>}]} {
    %c0_i32 = arith.constant 0 : i32
    %0 = arith.cmpi eq, %arg1, %c0_i32 : i32
    %1 = arith.extui %0 : i1 to i32
    %c0_i32_0 = arith.constant 0 : i32
    %2 = arith.cmpi ne, %1, %c0_i32_0 : i32
    scf.if %2 {
      %cst_15 = arith.constant 0.000000e+00 : f32
      %20 = vector.broadcast %cst_15 : f32 to vector<16x128xf32>
      %c0_16 = arith.constant 0 : index
      %c0_17 = arith.constant 0 : index
      %21 = vector.load %arg7[%c0_16, %c0_17] : memref<16x128xf32, #tpu.memory_space<vmem>>, vector<16x128xf32>
      tpu.vector_store %arg7[%c0_16, %c0_17], %20 {strides = array<i32>} : memref<16x128xf32, #tpu.memory_space<vmem>>, vector<16x128xf32>,
    } else {
    }
    %c0 = arith.constant 0 : index
    %c0_1 = arith.constant 0 : index
    %3 = vector.load %arg2[%c0, %c0_1] : memref<16x128xf32, #tpu.memory_space<vmem>>, vector<16x128xf32>
    %c0_2 = arith.constant 0 : index
    %c0_3 = arith.constant 0 : index
    %4 = vector.load %arg3[%c0_2, %c0_3] : memref<128x128xf32, #tpu.memory_space<vmem>>, vector<128x128xf32>
    %cst = arith.constant dense<0.000000e+00> : vector<16x128xf32>
    %5 = tpu.matmul %3, %4, %cst {dimension_numbers = #tpu.dot_dimension_numbers<[1], [0], [0], [1], [0, 0, 1, 1], [], []>} : vector<16x128xf32>, vector<128x128xf32>, vector<16x128xf32> -> vector<16x128xf32>
    %6 = arith.index_cast %arg1 : i32 to index
    %c0_4 = arith.constant 0 : index
    %7 = vector.load %arg4[%6, %c0_4] : memref<1x128xf32, #tpu.memory_space<vmem>>, vector<1x128xf32>
    %8 = vector.broadcast %7 : vector<1x128xf32> to vector<16x128xf32>
    %9 = arith.addf %5, %8 : vector<16x128xf32>
    %cst_5 = arith.constant 0.000000e+00 : f32
    %10 = vector.broadcast %cst_5 : f32 to vector<16x128xf32>
    %11 = arith.maximumf %9, %10 : vector<16x128xf32>
    %c0_6 = arith.constant 0 : index
    %c0_7 = arith.constant 0 : index
    %12 = vector.load %arg7[%c0_6, %c0_7] : memref<16x128xf32, #tpu.memory_space<vmem>>, vector<16x128xf32>
    %c0_8 = arith.constant 0 : index
    %c0_9 = arith.constant 0 : index
    %13 = vector.load %arg5[%c0_8, %c0_9] : memref<128x128xf32, #tpu.memory_space<vmem>>, vector<128x128xf32>
    %cst_10 = arith.constant dense<0.000000e+00> : vector<16x128xf32>
    %14 = tpu.matmul %11, %13, %cst_10 {dimension_numbers = #tpu.dot_dimension_numbers<[1], [0], [0], [1], [0, 0, 1, 1], [], []>} : vector<16x128xf32>, vector<128x128xf32>, vector<16x128xf32> -> vector<16x128xf32>
    %15 = arith.addf %12, %14 : vector<16x128xf32>
    %c0_11 = arith.constant 0 : index
    %c0_12 = arith.constant 0 : index
    %16 = vector.load %arg7[%c0_11, %c0_12] : memref<16x128xf32, #tpu.memory_space<vmem>>, vector<16x128xf32>
    tpu.vector_store %arg7[%c0_11, %c0_12], %15 {strides = array<i32>} : memref<16x128xf32, #tpu.memory_space<vmem>>, vector<16x128xf32>,
    %c0_i32_13 = arith.constant 0 : i32
    %17 = arith.cmpi eq, %arg1, %c0_i32_13 : i32
    %18 = arith.extui %17 : i1 to i32
    %c0_i32_14 = arith.constant 0 : i32
    %19 = arith.cmpi ne, %18, %c0_i32_14 : i32
    scf.if %19 {
      %c0_15 = arith.constant 0 : index
      %c0_16 = arith.constant 0 : index
      %20 = vector.load %arg7[%c0_15, %c0_16] : memref<16x128xf32, #tpu.memory_space<vmem>>, vector<16x128xf32>
      %c0_17 = arith.constant 0 : index
      %c0_18 = arith.constant 0 : index
      %21 = vector.load %arg6[%c0_17, %c0_18] : memref<1x128xf32, #tpu.memory_space<vmem>>, vector<1x128xf32>
      %22 = vector.broadcast %21 : vector<1x128xf32> to vector<16x128xf32>
      %23 = arith.addf %20, %22 : vector<16x128xf32>
      %c0_19 = arith.constant 0 : index
      %c0_20 = arith.constant 0 : index
      %24 = vector.load %arg7[%c0_19, %c0_20] : memref<16x128xf32, #tpu.memory_space<vmem>>, vector<16x128xf32>
      tpu.vector_store %arg7[%c0_19, %c0_20], %23 {strides = array<i32>} : memref<16x128xf32, #tpu.memory_space<vmem>>, vector<16x128xf32>,
    } else {
    }
    return
  }
  func.func @transform_0(%arg0: i32, %arg1: i32) -> (i32, i32) {
    %c0_i32 = arith.constant 0 : i32
    %c0_i32_0 = arith.constant 0 : i32
    return %arg0, %c0_i32 : i32, i32
  }
  func.func @transform_1(%arg0: i32, %arg1: i32) -> (i32, i32) {
    %c0_i32 = arith.constant 0 : i32
    %c0_i32_0 = arith.constant 0 : i32
    return %c0_i32, %arg1 : i32, i32
  }
  func.func @transform_2(%arg0: i32, %arg1: i32) -> (i32, i32) {
    %c0_i32 = arith.constant 0 : i32
    %c0_i32_0 = arith.constant 0 : i32
    %c0_i32_1 = arith.constant 0 : i32
    return %c0_i32, %c0_i32_0 : i32, i32
  }
  func.func @transform_3(%arg0: i32, %arg1: i32) -> (i32, i32) {
    %c0_i32 = arith.constant 0 : i32
    %c0_i32_0 = arith.constant 0 : i32
    return %arg1, %c0_i32 : i32, i32
  }
  func.func @transform_4(%arg0: i32, %arg1: i32) -> (i32, i32) {
    %c0_i32 = arith.constant 0 : i32
    %c0_i32_0 = arith.constant 0 : i32
    %c0_i32_1 = arith.constant 0 : i32
    return %c0_i32, %c0_i32_0 : i32, i32
  }
  func.func @transform_5(%arg0: i32, %arg1: i32) -> (i32, i32) {
    %c0_i32 = arith.constant 0 : i32
    %c0_i32_0 = arith.constant 0 : i32
    return %arg0, %c0_i32 : i32, i32
  }
}

</mosaic_0001>

<llo_original>
// kernel: forward.1
$region0: #{forward.1}
  #allocation0 [shape = 'u32[]', space=smem, size = 0x4, offset = 0x4, fixed_abs, tag = 'smem constant byte address 0x4 - core index']
  #allocation1 [shape = 'u32[144,128]{1,0:T(1,128)}', space=vmem, size = 0x12000, scoped, tag = 'internal scratch']
  %s0 = inlined_call_operand.vmem [shape: f32[16,128], index: 0, kind: input, shape index: {}]
  %s1 = inlined_call_operand.hbm [shape: f32[128,128], index: 1, kind: input, shape index: {}]
  %s2 = inlined_call_operand.vmem [shape: f32[1,128], index: 2, kind: input, shape index: {}]
  %s3 = inlined_call_operand.hbm [shape: f32[128,128], index: 3, kind: input, shape index: {}]
  %s4 = inlined_call_operand.vmem [shape: f32[1,128], index: 4, kind: input, shape index: {}]
  %s5 = inlined_call_operand.vmem [shape: f32[16,128], index: 5, kind: output, shape index: {}]
  %s6 = sld [smem:[#allocation0]]
  $region46: #{forward.1} parent=0
    _
  %s8 = ssub.s32 1, %s6
  %s9 = scalar_select 0, %s8, %s6
  $region1: #{forward.1} parent=0
    #allocation2 [shape = 'u8[65536]{0}', space=vmem, size = 0x10000, scoped, tag = 'input window, operand 1, single buffered']
    #allocation3 [shape = 's32[1]{0}', space=sflag, size = 0x4, scoped, tag = 'scoped memory for forward.1']
    #allocation4 [shape = 'u8[65536]{0}', space=vmem, size = 0x10000, scoped, tag = 'input window, operand 3, single buffered']
    #allocation5 [shape = 's32[1]{0}', space=sflag, size = 0x4, scoped, tag = 'scoped memory for forward.1']
    %10 = vsyncpa [#allocation3], 0
    %11 = vsyncpa [#allocation5], 0
    // Predicated region
    $region2: #{forward.1} parent=1 // pred_check
      _
    $region3: #{forward.1} parent=1 // pred_check_branch
      %13 = sbr.rel (0) target = $region5
    $region4: #{forward.1} parent=1 // pred_region
      _
    $region5: #{forward.1} parent=1 // pred_fallthru
      _
    // Predicated region
    $region6: #{forward.1} parent=1 // pred_check
      _
    $region7: #{forward.1} parent=1 // pred_check_branch
      %15 = sbr.rel (0) target = $region9
    $region8: #{forward.1} parent=1 // pred_region
      %s17 = ssub.s32 2048, 2048
      %18 = vsyncadd [#allocation3], %s17
      %s19 = sshll.u32 [#allocation2], 4
      %s20 = int_to_ptr.vmem [resolvable:$true] %s19
      %25 = dma.hbm_to_vmem [thread:$0]  %s1, 2048, %s20, [#allocation3], 128, 128, 8
    $region9: #{forward.1} parent=1 // pred_fallthru
      _
    // Predicated region
    $region10: #{forward.1} parent=1 // pred_check
      _
    $region11: #{forward.1} parent=1 // pred_check_branch
      %27 = sbr.rel (0) target = $region13
    $region12: #{forward.1} parent=1 // pred_region
      _
    $region13: #{forward.1} parent=1 // pred_fallthru
      _
    // Predicated region
    $region14: #{forward.1} parent=1 // pred_check
      _
    $region15: #{forward.1} parent=1 // pred_check_branch
      %29 = sbr.rel (0) target = $region17
    $region16: #{forward.1} parent=1 // pred_region
      %s31 = ssub.s32 2048, 2048
      %32 = vsyncadd [#allocation5], %s31
      %s33 = sshll.u32 [#allocation4], 4
      %s34 = int_to_ptr.vmem [resolvable:$true] %s33
      %39 = dma.hbm_to_vmem [thread:$0]  %s3, 2048, %s34, [#allocation5], 128, 128, 8
    $region17: #{forward.1} parent=1 // pred_fallthru
      _
    // Predicated region
    $region18: #{forward.1} parent=1 // pred_check
      _
    $region19: #{forward.1} parent=1 // pred_check_branch
      %41 = sbr.rel (0) target = $region21
    $region20: #{forward.1} parent=1 // pred_region
      _
    $region21: #{forward.1} parent=1 // pred_fallthru
      _
    // Predicated region
    $region22: #{forward.1} parent=1 // pred_check
      _
    $region23: #{forward.1} parent=1 // pred_check_branch
      %43 = sbr.rel (0) target = $region25
    $region24: #{forward.1} parent=1 // pred_region
      %44 = dma.done [#allocation3], 2048
    $region25: #{forward.1} parent=1 // pred_fallthru
      _
    // Predicated region
    $region26: #{forward.1} parent=1 // pred_check
      _
    $region27: #{forward.1} parent=1 // pred_check_branch
      %46 = sbr.rel (0) target = $region29
    $region28: #{forward.1} parent=1 // pred_region
      %47 = dma.done [#allocation5], 2048
    $region29: #{forward.1} parent=1 // pred_fallthru
      _
    %p48 = scmp.eq.s32.totalorder 0, 0
    // Predicated region
    $region30: #{forward.1} parent=1 // pred_check
      %p49 = pneg %p48
    $region31: #{forward.1} parent=1 // pred_check_branch
      %51 = sbr.rel (%p49) target = $region33
    $region32: #{forward.1} parent=1 // pred_region
      %52 = vst [vmem:[%s5] sm:$0xff] 0.0
      %53 = vst [vmem:[%s5 + $0x8] sm:$0xff] 0.0
    $region33: #{forward.1} parent=1 // pred_fallthru
      _
    %v54 = vld [vmem:[%s0] sm:$0xff]
    %v55 = vld [vmem:[%s0 + $0x8] sm:$0xff]
    %v56 = vld [vmem:[#allocation2] sm:$0xff]
    %v57 = vld [vmem:[#allocation2 + $0x8] sm:$0xff]
    %v58 = vld [vmem:[#allocation2 + $0x10] sm:$0xff]
    %v59 = vld [vmem:[#allocation2 + $0x18] sm:$0xff]
    %v60 = vld [vmem:[#allocation2 + $0x20] sm:$0xff]
    %v61 = vld [vmem:[#allocation2 + $0x28] sm:$0xff]
    %v62 = vld [vmem:[#allocation2 + $0x30] sm:$0xff]
    %v63 = vld [vmem:[#allocation2 + $0x38] sm:$0xff]
    %v64 = vld [vmem:[#allocation2 + $0x40] sm:$0xff]
    %v65 = vld [vmem:[#allocation2 + $0x48] sm:$0xff]
    %v66 = vld [vmem:[#allocation2 + $0x50] sm:$0xff]
    %v67 = vld [vmem:[#allocation2 + $0x58] sm:$0xff]
    %v68 = vld [vmem:[#allocation2 + $0x60] sm:$0xff]
    %v69 = vld [vmem:[#allocation2 + $0x68] sm:$0xff]
    %v70 = vld [vmem:[#allocation2 + $0x70] sm:$0xff]
    %v71 = vld [vmem:[#allocation2 + $0x78] sm:$0xff]
    %v72 = vld [vmem:[%s2] sm:$0x1]
    %v74 = vlaneseq
    %v75 = vshrl.u32 %v74, 7
    %v76 = vsub.s32 0, %v75
    %v77 = vrot.slane %v72, %v76
    %79 = vmatprep.subr.mxu0 0.0
    %80 = vmatpush1.msra.mxu0 %v56
    %81 = vmatprep.subr.mxu0 0.0
    %82 = vmatpush1.msra.mxu0 %v57
    %83 = vmatprep.subr.mxu0 0.0
    %84 = vmatpush1.msra.mxu0 %v58
    %85 = vmatprep.subr.mxu0 0.0
    %86 = vmatpush1.msra.mxu0 %v59
    %87 = vmatprep.subr.mxu0 0.0
    %88 = vmatpush1.msra.mxu0 %v60
    %89 = vmatprep.subr.mxu0 0.0
    %90 = vmatpush1.msra.mxu0 %v61
    %91 = vmatprep.subr.mxu0 0.0
    %92 = vmatpush1.msra.mxu0 %v62
    %93 = vmatprep.subr.mxu0 0.0
    %94 = vmatpush1.msra.mxu0 %v63
    %95 = vmatprep.subr.mxu0 0.0
    %96 = vmatpush1.msra.mxu0 %v64
    %97 = vmatprep.subr.mxu0 0.0
    %98 = vmatpush1.msra.mxu0 %v65
    %99 = vmatprep.subr.mxu0 0.0
    %100 = vmatpush1.msra.mxu0 %v66
    %101 = vmatprep.subr.mxu0 0.0
    %102 = vmatpush1.msra.mxu0 %v67
    %103 = vmatprep.subr.mxu0 0.0
    %104 = vmatpush1.msra.mxu0 %v68
    %105 = vmatprep.subr.mxu0 0.0
    %106 = vmatpush1.msra.mxu0 %v69
    %107 = vmatprep.subr.mxu0 0.0
    %108 = vmatpush1.msra.mxu0 %v70
    %109 = vmatprep.subr.mxu0 0.0
    %110 = vmatpush1.msra.mxu0 %v71
    %111 = vmatprep.subr.mxu0 0.0
    %112 = vmatpush1.msra.mxu0 0.0
    %113 = vmatprep.subr.mxu0 0.0
    %114 = vmatpush1.msra.mxu0 0.0
    %115 = vmatprep.subr.mxu0 0.0
    %116 = vmatpush1.msra.mxu0 0.0
    %117 = vmatprep.subr.mxu0 0.0
    %118 = vmatpush1.msra.mxu0 0.0
    %119 = vmatprep.subr.mxu0 0.0
    %120 = vmatpush1.msra.mxu0 0.0
    %121 = vmatprep.subr.mxu0 0.0
    %122 = vmatpush1.msra.mxu0 0.0
    %123 = vmatprep.subr.mxu0 0.0
    %124 = vmatpush1.msra.mxu0 0.0
    %125 = vmatprep.subr.mxu0 0.0
    %126 = vmatpush1.msra.mxu0 0.0
    %127 = vmatprep.subr.mxu0 0.0
    %128 = vmatpush1.msra.mxu0 0.0
    %129 = vmatprep.subr.mxu0 0.0
    %130 = vmatpush1.msra.mxu0 0.0
    %131 = vmatprep.subr.mxu0 0.0
    %132 = vmatpush1.msra.mxu0 0.0
    %133 = vmatprep.subr.mxu0 0.0
    %134 = vmatpush1.msra.mxu0 0.0
    %135 = vmatprep.subr.mxu0 0.0
    %136 = vmatpush1.msra.mxu0 0.0
    %137 = vmatprep.subr.mxu0 0.0
    %138 = vmatpush1.msra.mxu0 0.0
    %139 = vmatprep.subr.mxu0 0.0
    %140 = vmatpush1.msra.mxu0 0.0
    %141 = vmatprep.subr.mxu0 0.0
    %142 = vmatpush1.msra.mxu0 0.0
    %143 = vmatprep.mubr.f32.mxu0 0.0
    %144 = vmatmul.mubr.f32.gmra.mrb[0].mxu0 %v54
    %v145 = vpop.f32.mrb[0].mxu0
    %v146 = vadd.f32 %v77, %v145
    %v147 = vpop.f32.mrb[0].mxu0
    %148 = vmatprep.mubr.f32.mxu0 0.0
    %149 = vmatmul.mubr.f32.gmra.mrb[0].mxu0 %v55
    %v150 = vpop.f32.mrb[0].mxu0
    %v151 = vadd.f32 %v77, %v150
    %v152 = vpop.f32.mrb[0].mxu0
    %153 = vdwg.mxu0
    %v154 = vmax.f32 %v146, 0.0
    %v155 = vmax.f32 %v151, 0.0
    %v156 = vld [vmem:[%s5] sm:$0xff]
    %v157 = vld [vmem:[%s5 + $0x8] sm:$0xff]
    %v158 = vld [vmem:[#allocation4] sm:$0xff]
    %v159 = vld [vmem:[#allocation4 + $0x8] sm:$0xff]
    %v160 = vld [vmem:[#allocation4 + $0x10] sm:$0xff]
    %v161 = vld [vmem:[#allocation4 + $0x18] sm:$0xff]
    %v162 = vld [vmem:[#allocation4 + $0x20] sm:$0xff]
    %v163 = vld [vmem:[#allocation4 + $0x28] sm:$0xff]
    %v164 = vld [vmem:[#allocation4 + $0x30] sm:$0xff]
    %v165 = vld [vmem:[#allocation4 + $0x38] sm:$0xff]
    %v166 = vld [vmem:[#allocation4 + $0x40] sm:$0xff]
    %v167 = vld [vmem:[#allocation4 + $0x48] sm:$0xff]
    %v168 = vld [vmem:[#allocation4 + $0x50] sm:$0xff]
    %v169 = vld [vmem:[#allocation4 + $0x58] sm:$0xff]
    %v170 = vld [vmem:[#allocation4 + $0x60] sm:$0xff]
    %v171 = vld [vmem:[#allocation4 + $0x68] sm:$0xff]
    %v172 = vld [vmem:[#allocation4 + $0x70] sm:$0xff]
    %v173 = vld [vmem:[#allocation4 + $0x78] sm:$0xff]
    %174 = vmatprep.subr.mxu0 0.0
    %175 = vmatpush1.msra.mxu0 %v158
    %176 = vmatprep.subr.mxu0 0.0
    %177 = vmatpush1.msra.mxu0 %v159
    %178 = vmatprep.subr.mxu0 0.0
    %179 = vmatpush1.msra.mxu0 %v160
    %180 = vmatprep.subr.mxu0 0.0
    %181 = vmatpush1.msra.mxu0 %v161
    %182 = vmatprep.subr.mxu0 0.0
    %183 = vmatpush1.msra.mxu0 %v162
    %184 = vmatprep.subr.mxu0 0.0
    %185 = vmatpush1.msra.mxu0 %v163
    %186 = vmatprep.subr.mxu0 0.0
    %187 = vmatpush1.msra.mxu0 %v164
    %188 = vmatprep.subr.mxu0 0.0
    %189 = vmatpush1.msra.mxu0 %v165
    %190 = vmatprep.subr.mxu0 0.0
    %191 = vmatpush1.msra.mxu0 %v166
    %192 = vmatprep.subr.mxu0 0.0
    %193 = vmatpush1.msra.mxu0 %v167
    %194 = vmatprep.subr.mxu0 0.0
    %195 = vmatpush1.msra.mxu0 %v168
    %196 = vmatprep.subr.mxu0 0.0
    %197 = vmatpush1.msra.mxu0 %v169
    %198 = vmatprep.subr.mxu0 0.0
    %199 = vmatpush1.msra.mxu0 %v170
    %200 = vmatprep.subr.mxu0 0.0
    %201 = vmatpush1.msra.mxu0 %v171
    %202 = vmatprep.subr.mxu0 0.0
    %203 = vmatpush1.msra.mxu0 %v172
    %204 = vmatprep.subr.mxu0 0.0
    %205 = vmatpush1.msra.mxu0 %v173
    %206 = vmatprep.subr.mxu0 0.0
    %207 = vmatpush1.msra.mxu0 0.0
    %208 = vmatprep.subr.mxu0 0.0
    %209 = vmatpush1.msra.mxu0 0.0
    %210 = vmatprep.subr.mxu0 0.0
    %211 = vmatpush1.msra.mxu0 0.0
    %212 = vmatprep.subr.mxu0 0.0
    %213 = vmatpush1.msra.mxu0 0.0
    %214 = vmatprep.subr.mxu0 0.0
    %215 = vmatpush1.msra.mxu0 0.0
    %216 = vmatprep.subr.mxu0 0.0
    %217 = vmatpush1.msra.mxu0 0.0
    %218 = vmatprep.subr.mxu0 0.0
    %219 = vmatpush1.msra.mxu0 0.0
    %220 = vmatprep.subr.mxu0 0.0
    %221 = vmatpush1.msra.mxu0 0.0
    %222 = vmatprep.subr.mxu0 0.0
    %223 = vmatpush1.msra.mxu0 0.0
    %224 = vmatprep.subr.mxu0 0.0
    %225 = vmatpush1.msra.mxu0 0.0
    %226 = vmatprep.subr.mxu0 0.0
    %227 = vmatpush1.msra.mxu0 0.0
    %228 = vmatprep.subr.mxu0 0.0
    %229 = vmatpush1.msra.mxu0 0.0
    %230 = vmatprep.subr.mxu0 0.0
    %231 = vmatpush1.msra.mxu0 0.0
    %232 = vmatprep.subr.mxu0 0.0
    %233 = vmatpush1.msra.mxu0 0.0
    %234 = vmatprep.subr.mxu0 0.0
    %235 = vmatpush1.msra.mxu0 0.0
    %236 = vmatprep.subr.mxu0 0.0
    %237 = vmatpush1.msra.mxu0 0.0
    %238 = vmatprep.mubr.f32.mxu0 0.0
    %239 = vmatmul.mubr.f32.gmra.mrb[0].mxu0 %v154
    %v240 = vpop.f32.mrb[0].mxu0
    %v241 = vadd.f32 0.0, %v240
    %v242 = vpop.f32.mrb[0].mxu0
    %243 = vmatprep.mubr.f32.mxu0 0.0
    %244 = vmatmul.mubr.f32.gmra.mrb[0].mxu0 %v155
    %v245 = vpop.f32.mrb[0].mxu0
    %v246 = vadd.f32 0.0, %v245
    %v247 = vpop.f32.mrb[0].mxu0
    %248 = vdwg.mxu0
    %v249 = vadd.f32 %v156, %v241
    %v250 = vadd.f32 %v157, %v246
    %251 = vst [vmem:[%s5] sm:$0xff] %v249
    %252 = vst [vmem:[%s5 + $0x8] sm:$0xff] %v250
    // Predicated region
    $region34: #{forward.1} parent=1 // pred_check
      %p253 = pneg %p48
    $region35: #{forward.1} parent=1 // pred_check_branch
      %255 = sbr.rel (%p253) target = $region37
    $region36: #{forward.1} parent=1 // pred_region
      %v256 = vld [vmem:[%s5] sm:$0xff]
      %v257 = vld [vmem:[%s5 + $0x8] sm:$0xff]
      %v258 = vld [vmem:[%s4] sm:$0x1]
      %v260 = vlaneseq
      %v261 = vshrl.u32 %v260, 7
      %v262 = vsub.s32 0, %v261
      %v263 = vrot.slane %v258, %v262
      %v265 = vadd.f32 %v256, %v263
      %v266 = vadd.f32 %v257, %v263
      %267 = vst [vmem:[%s5] sm:$0xff] %v265
      %268 = vst [vmem:[%s5 + $0x8] sm:$0xff] %v266
    $region37: #{forward.1} parent=1 // pred_fallthru
      _
    // Predicated region
    $region38: #{forward.1} parent=1 // pred_check
      _
    $region39: #{forward.1} parent=1 // pred_check_branch
      %270 = sbr.rel (0) target = $region41
    $region40: #{forward.1} parent=1 // pred_region
      _
    $region41: #{forward.1} parent=1 // pred_fallthru
      _
    // Predicated region
    $region42: #{forward.1} parent=1 // pred_check
      _
    $region43: #{forward.1} parent=1 // pred_check_branch
      %272 = sbr.rel (0) target = $region45
    $region44: #{forward.1} parent=1 // pred_region
      _
    $region45: #{forward.1} parent=1 // pred_fallthru
      _
    %273 = vsyncpa [#allocation3], 1
    %274 = vsyncpa [#allocation5], 1

</llo_original>
